<compile_context>
chip_gen: v7x
topology: tpu7x:2x2x1
jax: 0.10.0
libtpu: 0.0.40
codegen_flags: <defaults>
</compile_context>

<pallas_src>
import functools

import jax
import jax.numpy as jnp
import numpy as np
from jax.experimental import pallas as pl
from jax.experimental.pallas import tpu as pltpu

LANE = 128
MAX_TILE_ROWS = 512   # 512*128*4B = 256 KiB per f32 input block


def _silog_kernel(pred_ref, gt_ref, out_ref, sumsq_acc, sumd_acc, cnt_acc, *,
                  lam, min_depth, max_depth, total_pixels):
    k = pl.program_id(1)            # row-tile (reduction) axis
    c = pl.program_id(2)            # channel axis (innermost: pred block reused)
    nk = pl.num_programs(1)
    nc = pl.num_programs(2)

    @pl.when(jnp.logical_and(k == 0, c == 0))
    def _():
        sumsq_acc[...] = jnp.zeros_like(sumsq_acc)
        sumd_acc[...] = jnp.zeros_like(sumd_acc)
        cnt_acc[...] = jnp.zeros_like(cnt_acc)

    pred = pred_ref[0].astype(jnp.float32)       # (TILE_ROWS, 128)
    gt = gt_ref[0, 0].astype(jnp.float32)        # (TILE_ROWS, 128)

    mask = jnp.logical_and(gt > min_depth, gt < max_depth)
    # One EUP log instead of two: log(pred) - log(gt) == log(pred * (1/gt)).
    diff = jnp.where(mask, jnp.log(pred * pl.reciprocal(gt)), 0.0)

    # Pure VPU accumulation; defer all cross-lane reductions to the finalize.
    sumsq_acc[...] += diff * diff
    sumd_acc[...] += diff
    cnt_acc[...] += mask.astype(jnp.float32)

    @pl.when(jnp.logical_and(k == nk - 1, c == nc - 1))
    def _():
        num_pixels = jnp.sum(cnt_acc[...], keepdims=True) + 1e-6    # (1, 1)
        sum_sq = jnp.sum(sumsq_acc[...], keepdims=True)             # (1, 1)
        sum_d = jnp.sum(sumd_acc[...], keepdims=True)               # (1, 1)
        loss1 = sum_sq / num_pixels - lam * (sum_d / num_pixels) ** 2
        weight = num_pixels / float(total_pixels)
        out_ref[0] = (loss1 * weight).astype(out_ref.dtype)


def pixel_unshuffle(fm, r):
    """(B, C, H, W) -> (B, C*r*r, H//r, W//r), matching the torch reference."""
    b, c, h, w = fm.shape
    fm_view = fm.reshape(b, c, h // r, r, w // r, r)
    return jnp.transpose(fm_view, (0, 1, 3, 5, 2, 4)).reshape(
        b, c * r * r, h // r, w // r)


def silog_loss(depth_prediction, gts, *, SI_loss_lambda=0.85, max_depth=10.0,
               min_depth=0.001):
    """depth_prediction: (B, H, W) float; gts: (B, C, H, W) float."""
    # unsqueeze(1) -> channel dim of size 1 -> scale_factor = int(sqrt(1)) = 1
    scale_factor = int(np.sqrt(1))
    reshaped_gt = pixel_unshuffle(gts, scale_factor)       # identity for r=1
    B, C, H, W = reshaped_gt.shape
    total_pixels = C * H * W
    n = H * W

    # Lane-dense layout: n pixels -> (rows, 128); tile rows for pipelining.
    rows = pl.cdiv(n, LANE)
    if rows <= MAX_TILE_ROWS:
        tile_rows = rows                       # block == full dims -> legal
    else:
        tile_rows = MAX_TILE_ROWS              # multiple of 8 -> legal
        rows = pl.cdiv(rows, tile_rows) * tile_rows
    n_pad = rows * LANE
    num_k = rows // tile_rows

    # No broadcast / astype in the wrapper: pred stays (B, n), native dtype.
    pred_flat = depth_prediction.reshape(B, n)
    gt_flat = reshaped_gt.reshape(B, C, n)
    if n_pad != n:
        # Pad gt with 0.0 (outside [min_depth, max_depth] -> masked out) and
        # pred with 1.0 (keeps log finite; masked anyway).
        pred_flat = jnp.pad(pred_flat, ((0, 0), (0, n_pad - n)),
                            constant_values=1.0)
        gt_flat = jnp.pad(gt_flat, ((0, 0), (0, 0), (0, n_pad - n)),
                          constant_values=0.0)
    pred_r = pred_flat.reshape(B, rows, LANE)
    gt_r = gt_flat.reshape(B, C, rows, LANE)

    kernel = functools.partial(
        _silog_kernel,
        lam=float(SI_loss_lambda),
        min_depth=float(min_depth),
        max_depth=float(max_depth),
        total_pixels=total_pixels,
    )

    p_bytes = jnp.dtype(pred_r.dtype).itemsize
    g_bytes = jnp.dtype(gt_r.dtype).itemsize
    cost = pl.CostEstimate(
        flops=int(9 * B * C * n_pad),
        transcendentals=int(2 * B * C * n_pad),
        bytes_accessed=int(B * n_pad * p_bytes + B * C * n_pad * g_bytes + 4 * B),
    )

    per_batch = pl.pallas_call(
        kernel,
        out_shape=jax.ShapeDtypeStruct((B, 1, 1), jnp.float32),
        grid_spec=pltpu.PrefetchScalarGridSpec(
            num_scalar_prefetch=0,
            grid=(B, num_k, C),
            in_specs=[
                # pred block ignores the channel axis -> fetched once per
                # (b, k) and shared across C.
                pl.BlockSpec((1, tile_rows, LANE), lambda b, k, c: (b, k, 0)),
                pl.BlockSpec((1, 1, tile_rows, LANE),
                             lambda b, k, c: (b, c, k, 0)),
            ],
            out_specs=pl.BlockSpec((1, 1, 1), lambda b, k, c: (b, 0, 0)),
            scratch_shapes=[pltpu.VMEM((tile_rows, LANE), jnp.float32)] * 3,
        ),
        compiler_params=pltpu.CompilerParams(
            dimension_semantics=("parallel", "arbitrary", "arbitrary")),
        cost_estimate=cost,
    )(pred_r, gt_r)

    # Tiny final weighted sum over batches in JAX (keeps batch axis parallel).
    return jnp.sum(per_batch)


def _silog_loss_ref(depth_prediction, gts, *, SI_loss_lambda=0.85,
                    max_depth=10.0, min_depth=0.001):
    """Pure-JAX reference mirroring the PyTorch forward exactly."""
    pred4 = depth_prediction[:, None, :, :]
    reshaped_gt = pixel_unshuffle(gts, int(np.sqrt(pred4.shape[1])))
    diff = jnp.log(pred4) - jnp.log(reshaped_gt)
    mask = (reshaped_gt > min_depth) & (reshaped_gt < max_depth)
    diff = jnp.where(mask, diff, jnp.zeros_like(diff))
    B = diff.shape[0]
    diff = diff.reshape(B, -1)
    num_pixels = mask.reshape(B, -1).sum(axis=-1) + 1e-6
    loss1 = (diff ** 2).sum(axis=-1) / num_pixels
    loss1 = loss1 - SI_loss_lambda * (diff.sum(axis=-1) / num_pixels) ** 2
    total_pixels = (reshaped_gt.shape[1] * reshaped_gt.shape[2]
                    * reshaped_gt.shape[3])
    weight = num_pixels.astype(diff.dtype) / total_pixels
    return (loss1 * weight).sum()


if __name__ == "__main__":
    key = jax.random.PRNGKey(0)

    def make_inputs(k, B, C, H, W):
        k1, k2 = jax.random.split(k)
        pred = jax.random.uniform(k1, (B, H, W), minval=0.1, maxval=9.0,
                                  dtype=jnp.float32)
        # gt in (0, 12): some pixels fall outside [min_depth, max_depth] and
        # get masked out, exercising the mask path.
        gts = jax.random.uniform(k2, (B, C, H, W), minval=0.0, maxval=12.0,
                                 dtype=jnp.float32)
        return pred, gts

    cases = [
        (2, 1, 16, 16),    # baseline (single tile, no padding)
        (2, 2, 20, 20),    # lane padding + pred shared across C>1 channels
        (1, 1, 260, 260),  # multi row-tile reduction (rows > MAX_TILE_ROWS)
    ]
    keys = jax.random.split(key, len(cases))
    for kk, (B, C, H, W) in zip(keys, cases):
        pred, gts = make_inputs(kk, B, C, H, W)
        loss = jax.block_until_ready(silog_loss(pred, gts))
        ref = jax.block_until_ready(_silog_loss_ref(pred, gts))
        assert np.allclose(np.asarray(loss), np.asarray(ref),
                           rtol=1e-4, atol=1e-6), ((B, C, H, W),
                                                   float(loss), float(ref))

    print("KERNEL_OK")
</pallas_src>

<mosaic_0001>
module attributes {stable_mosaic.version = 11 : i64} {
  func.func @_silog_kernel(%arg0: i32, %arg1: i32, %arg2: i32, %arg3: memref<1x2x128xf32, #tpu.memory_space<vmem>>, %arg4: memref<1x1x2x128xf32, #tpu.memory_space<vmem>>, %arg5: memref<1x1x1xf32, #tpu.memory_space<vmem>>, %arg6: memref<2x128xf32, #tpu.memory_space<vmem>>, %arg7: memref<2x128xf32, #tpu.memory_space<vmem>>, %arg8: memref<2x128xf32, #tpu.memory_space<vmem>>) attributes {dimension_semantics = [#tpu.dimension_semantics<parallel>, #tpu.dimension_semantics<arbitrary>, #tpu.dimension_semantics<arbitrary>], iteration_bounds = array<i64: 2, 1, 1>, scalar_prefetch = 0 : i64, scratch_operands = 3 : i64, tpu.core_type = #tpu.core_type<tc>, window_params = [{transform_indices = @transform_0, window_bounds = array<i64: 1, 2, 128>}, {transform_indices = @transform_1, window_bounds = array<i64: 1, 1, 2, 128>}, {transform_indices = @transform_2, window_bounds = array<i64: 1, 1, 1>}]} {
    %c0_i32 = arith.constant 0 : i32
    %0 = arith.cmpi eq, %arg1, %c0_i32 : i32
    %c0_i32_0 = arith.constant 0 : i32
    %1 = arith.cmpi eq, %arg2, %c0_i32_0 : i32
    %2 = arith.andi %0, %1 : i1
    %3 = arith.extui %2 : i1 to i32
    %c0_i32_1 = arith.constant 0 : i32
    %4 = arith.cmpi ne, %3, %c0_i32_1 : i32
    scf.if %4 {
      %cst_25 = arith.constant 0.000000e+00 : f32
      %36 = vector.broadcast %cst_25 : f32 to vector<2x128xf32>
      %c0_26 = arith.constant 0 : index
      %c0_27 = arith.constant 0 : index
      %37 = vector.load %arg6[%c0_26, %c0_27] : memref<2x128xf32, #tpu.memory_space<vmem>>, vector<2x128xf32>
      tpu.vector_store %arg6[%c0_26, %c0_27], %36 {strides = array<i32>} : memref<2x128xf32, #tpu.memory_space<vmem>>, vector<2x128xf32>,
      %cst_28 = arith.constant 0.000000e+00 : f32
      %38 = vector.broadcast %cst_28 : f32 to vector<2x128xf32>
      %c0_29 = arith.constant 0 : index
      %c0_30 = arith.constant 0 : index
      %39 = vector.load %arg7[%c0_29, %c0_30] : memref<2x128xf32, #tpu.memory_space<vmem>>, vector<2x128xf32>
      tpu.vector_store %arg7[%c0_29, %c0_30], %38 {strides = array<i32>} : memref<2x128xf32, #tpu.memory_space<vmem>>, vector<2x128xf32>,
      %cst_31 = arith.constant 0.000000e+00 : f32
      %40 = vector.broadcast %cst_31 : f32 to vector<2x128xf32>
      %c0_32 = arith.constant 0 : index
      %c0_33 = arith.constant 0 : index
      %41 = vector.load %arg8[%c0_32, %c0_33] : memref<2x128xf32, #tpu.memory_space<vmem>>, vector<2x128xf32>
      tpu.vector_store %arg8[%c0_32, %c0_33], %40 {strides = array<i32>} : memref<2x128xf32, #tpu.memory_space<vmem>>, vector<2x128xf32>,
    } else {
    }
    %c0 = arith.constant 0 : index
    %c0_2 = arith.constant 0 : index
    %c0_3 = arith.constant 0 : index
    %5 = vector.load %arg3[%c0, %c0_2, %c0_3] : memref<1x2x128xf32, #tpu.memory_space<vmem>>, vector<1x2x128xf32>
    %6 = vector.shape_cast %5 : vector<1x2x128xf32> to vector<2x128xf32>
    %c0_4 = arith.constant 0 : index
    %c0_5 = arith.constant 0 : index
    %c0_6 = arith.constant 0 : index
    %c0_7 = arith.constant 0 : index
    %7 = vector.load %arg4[%c0_4, %c0_5, %c0_6, %c0_7] : memref<1x1x2x128xf32, #tpu.memory_space<vmem>>, vector<1x1x2x128xf32>
    %8 = vector.shape_cast %7 : vector<1x1x2x128xf32> to vector<2x128xf32>
    %cst = arith.constant 1.000000e-03 : f32
    %9 = vector.broadcast %cst : f32 to vector<2x128xf32>
    %10 = arith.cmpf ogt, %8, %9 : vector<2x128xf32>
    %cst_8 = arith.constant 1.000000e+01 : f32
    %11 = vector.broadcast %cst_8 : f32 to vector<2x128xf32>
    %12 = arith.cmpf olt, %8, %11 : vector<2x128xf32>
    %13 = arith.andi %10, %12 : vector<2x128xi1>
    %14 = tpu.reciprocal %8 : vector<2x128xf32> -> vector<2x128xf32>
    %15 = arith.mulf %6, %14 : vector<2x128xf32>
    %16 = math.log %15 : vector<2x128xf32>
    %cst_9 = arith.constant 0.000000e+00 : f32
    %17 = vector.broadcast %cst_9 : f32 to vector<2x128xf32>
    %18 = arith.select %13, %16, %17 : vector<2x128xi1>, vector<2x128xf32>
    %c0_10 = arith.constant 0 : index
    %c0_11 = arith.constant 0 : index
    %19 = vector.load %arg6[%c0_10, %c0_11] : memref<2x128xf32, #tpu.memory_space<vmem>>, vector<2x128xf32>
    %20 = arith.mulf %18, %18 : vector<2x128xf32>
    %21 = arith.addf %19, %20 : vector<2x128xf32>
    %c0_12 = arith.constant 0 : index
    %c0_13 = arith.constant 0 : index
    %22 = vector.load %arg6[%c0_12, %c0_13] : memref<2x128xf32, #tpu.memory_space<vmem>>, vector<2x128xf32>
    tpu.vector_store %arg6[%c0_12, %c0_13], %21 {strides = array<i32>} : memref<2x128xf32, #tpu.memory_space<vmem>>, vector<2x128xf32>,
    %c0_14 = arith.constant 0 : index
    %c0_15 = arith.constant 0 : index
    %23 = vector.load %arg7[%c0_14, %c0_15] : memref<2x128xf32, #tpu.memory_space<vmem>>, vector<2x128xf32>
    %24 = arith.addf %23, %18 : vector<2x128xf32>
    %c0_16 = arith.constant 0 : index
    %c0_17 = arith.constant 0 : index
    %25 = vector.load %arg7[%c0_16, %c0_17] : memref<2x128xf32, #tpu.memory_space<vmem>>, vector<2x128xf32>
    tpu.vector_store %arg7[%c0_16, %c0_17], %24 {strides = array<i32>} : memref<2x128xf32, #tpu.memory_space<vmem>>, vector<2x128xf32>,
    %c0_18 = arith.constant 0 : index
    %c0_19 = arith.constant 0 : index
    %26 = vector.load %arg8[%c0_18, %c0_19] : memref<2x128xf32, #tpu.memory_space<vmem>>, vector<2x128xf32>
    %27 = arith.extui %13 : vector<2x128xi1> to vector<2x128xi32>
    %28 = arith.sitofp %27 : vector<2x128xi32> to vector<2x128xf32>
    %29 = arith.addf %26, %28 : vector<2x128xf32>
    %c0_20 = arith.constant 0 : index
    %c0_21 = arith.constant 0 : index
    %30 = vector.load %arg8[%c0_20, %c0_21] : memref<2x128xf32, #tpu.memory_space<vmem>>, vector<2x128xf32>
    tpu.vector_store %arg8[%c0_20, %c0_21], %29 {strides = array<i32>} : memref<2x128xf32, #tpu.memory_space<vmem>>, vector<2x128xf32>,
    %c0_i32_22 = arith.constant 0 : i32
    %31 = arith.cmpi eq, %arg1, %c0_i32_22 : i32
    %c0_i32_23 = arith.constant 0 : i32
    %32 = arith.cmpi eq, %arg2, %c0_i32_23 : i32
    %33 = arith.andi %31, %32 : i1
    %34 = arith.extui %33 : i1 to i32
    %c0_i32_24 = arith.constant 0 : i32
    %35 = arith.cmpi ne, %34, %c0_i32_24 : i32
    scf.if %35 {
      %c0_25 = arith.constant 0 : index
      %c0_26 = arith.constant 0 : index
      %36 = vector.load %arg8[%c0_25, %c0_26] : memref<2x128xf32, #tpu.memory_space<vmem>>, vector<2x128xf32>
      %37 = vector.shape_cast %36 : vector<2x128xf32> to vector<1x2x128xf32>
      %cst_27 = arith.constant dense<0.000000e+00> : vector<1xf32>
      %38 = vector.multi_reduction <add>, %37, %cst_27 [1, 2] : vector<1x2x128xf32> to vector<1xf32>
      %39 = vector.shape_cast %38 : vector<1xf32> to vector<1x1x1xf32>
      %40 = vector.extract %39[0, 0, 0] : f32 from vector<1x1x1xf32>
      %41 = vector.broadcast %40 : f32 to vector<1x1xf32>
      %cst_28 = arith.constant 9.99999997E-7 : f32
      %42 = vector.broadcast %cst_28 : f32 to vector<1x1xf32>
      %43 = arith.addf %41, %42 : vector<1x1xf32>
      %c0_29 = arith.constant 0 : index
      %c0_30 = arith.constant 0 : index
      %44 = vector.load %arg6[%c0_29, %c0_30] : memref<2x128xf32, #tpu.memory_space<vmem>>, vector<2x128xf32>
      %45 = vector.shape_cast %44 : vector<2x128xf32> to vector<1x2x128xf32>
      %cst_31 = arith.constant dense<0.000000e+00> : vector<1xf32>
      %46 = vector.multi_reduction <add>, %45, %cst_31 [1, 2] : vector<1x2x128xf32> to vector<1xf32>
      %47 = vector.shape_cast %46 : vector<1xf32> to vector<1x1x1xf32>
      %48 = vector.extract %47[0, 0, 0] : f32 from vector<1x1x1xf32>
      %49 = vector.broadcast %48 : f32 to vector<1x1xf32>
      %c0_32 = arith.constant 0 : index
      %c0_33 = arith.constant 0 : index
      %50 = vector.load %arg7[%c0_32, %c0_33] : memref<2x128xf32, #tpu.memory_space<vmem>>, vector<2x128xf32>
      %51 = vector.shape_cast %50 : vector<2x128xf32> to vector<1x2x128xf32>
      %cst_34 = arith.constant dense<0.000000e+00> : vector<1xf32>
      %52 = vector.multi_reduction <add>, %51, %cst_34 [1, 2] : vector<1x2x128xf32> to vector<1xf32>
      %53 = vector.shape_cast %52 : vector<1xf32> to vector<1x1x1xf32>
      %54 = vector.extract %53[0, 0, 0] : f32 from vector<1x1x1xf32>
      %55 = vector.broadcast %54 : f32 to vector<1x1xf32>
      %56 = arith.divf %49, %43 : vector<1x1xf32>
      %57 = arith.divf %55, %43 : vector<1x1xf32>
      %58 = arith.mulf %57, %57 : vector<1x1xf32>
      %cst_35 = arith.constant 8.500000e-01 : f32
      %59 = vector.broadcast %cst_35 : f32 to vector<1x1xf32>
      %60 = arith.mulf %59, %58 : vector<1x1xf32>
      %61 = arith.subf %56, %60 : vector<1x1xf32>
      %cst_36 = arith.constant 2.560000e+02 : f32
      %62 = vector.broadcast %cst_36 : f32 to vector<1x1xf32>
      %63 = arith.divf %43, %62 : vector<1x1xf32>
      %64 = arith.mulf %61, %63 : vector<1x1xf32>
      %c0_37 = arith.constant 0 : index
      %c0_38 = arith.constant 0 : index
      %c0_39 = arith.constant 0 : index
      %65 = vector.load %arg5[%c0_37, %c0_38, %c0_39] : memref<1x1x1xf32, #tpu.memory_space<vmem>>, vector<1x1x1xf32>
      %66 = vector.shape_cast %65 : vector<1x1x1xf32> to vector<1x1xf32>
      %67 = vector.shape_cast %64 : vector<1x1xf32> to vector<1x1x1xf32>
      tpu.vector_store %arg5[%c0_37, %c0_38, %c0_39], %67 {strides = array<i32>} : memref<1x1x1xf32, #tpu.memory_space<vmem>>, vector<1x1x1xf32>,
    } else {
    }
    return
  }
  func.func @transform_0(%arg0: i32, %arg1: i32, %arg2: i32) -> (i32, i32, i32) {
    %c0_i32 = arith.constant 0 : i32
    %c0_i32_0 = arith.constant 0 : i32
    return %arg0, %arg1, %c0_i32 : i32, i32, i32
  }
  func.func @transform_1(%arg0: i32, %arg1: i32, %arg2: i32) -> (i32, i32, i32, i32) {
    %c0_i32 = arith.constant 0 : i32
    %c0_i32_0 = arith.constant 0 : i32
    return %arg0, %arg2, %arg1, %c0_i32 : i32, i32, i32, i32
  }
  func.func @transform_2(%arg0: i32, %arg1: i32, %arg2: i32) -> (i32, i32, i32) {
    %c0_i32 = arith.constant 0 : i32
    %c0_i32_0 = arith.constant 0 : i32
    %c0_i32_1 = arith.constant 0 : i32
    return %arg0, %c0_i32, %c0_i32_0 : i32, i32, i32
  }
}

</mosaic_0001>

<llo_original>
// kernel: tpu_custom_call.1
$region0: #{tpu_custom_call.1}
  #allocation0 [shape = 'u32[]', space=smem, size = 0x4, offset = 0x4, fixed_abs, tag = 'smem constant byte address 0x4 - core index']
  #allocation1 [shape = 'u32[144,128]{1,0:T(1,128)}', space=vmem, size = 0x12000, scoped, tag = 'internal scratch']
  #allocation2 [shape = 'f32[2,128]{1,0:T(2,128)}', space=vmem, size = 0x400, scoped, tag = 'scratch operand']
  #allocation3 [shape = 'f32[2,128]{1,0:T(2,128)}', space=vmem, size = 0x400, scoped, tag = 'scratch operand']
  #allocation4 [shape = 'f32[2,128]{1,0:T(2,128)}', space=vmem, size = 0x400, scoped, tag = 'scratch operand']
  %s0 = inlined_call_operand.hbm [shape: f32[2,2,128], index: 0, kind: input, shape index: {}]
  %s1 = inlined_call_operand.hbm [shape: f32[2,1,2,128], index: 1, kind: input, shape index: {}]
  %s2 = inlined_call_operand.vmem [shape: f32[2,1,1], index: 2, kind: output, shape index: {}]
  %s3 = sld [smem:[#allocation0]]
  $region57: #{tpu_custom_call.1} parent=0
    _
  %s5 = ssub.s32 1, %s3
  %s6 = scalar_select 0, %s5, %s3
  $region1: #{tpu_custom_call.1} parent=0
    #allocation5 [shape = 'u8[2048]{0}', space=vmem, size = 0x800, scoped, tag = 'input window, operand 0']
    #allocation6 [shape = 's32[2]{0}', space=sflag, size = 0x8, scoped, tag = 'scoped memory for tpu_custom_call.1']
    #allocation7 [shape = 'u8[2048]{0}', space=vmem, size = 0x800, scoped, tag = 'input window, operand 1']
    #allocation8 [shape = 's32[2]{0}', space=sflag, size = 0x8, scoped, tag = 'scoped memory for tpu_custom_call.1']
    %7 = vsyncpa [#allocation6], 0
    %s8 = scalar_lea.sflag [#allocation6], 1
    %9 = vsyncpa %s8, 0
    %10 = vsyncpa [#allocation8], 0
    %s11 = scalar_lea.sflag [#allocation8], 1
    %12 = vsyncpa %s11, 0
    loop: start=0, step=1, limit=4
    $region2: #{tpu_custom_call.1} parent=1 // loop_pre_header
      _
    $region3: #{tpu_custom_call.1} parent=1 // loop_header
      %s14 = sphi 0, %s18
      %p15 = scmp.ge.s32.totalorder %s14, 4
      %s21 = sphi 0, %s40
      %s22 = sphi 0, %s36
      %s23 = sphi 0, %s32
      %s24 = sphi 0, %s21
      %s25 = sphi 0, %s22
      %s26 = sphi 0, %s23
      %s27 = sphi 0, %s24
      %s28 = sphi 0, %s25
      %s29 = sphi 0, %s26
      %s45 = sphi 0, %s47
      %s48 = sphi 0, %s45
      %s49 = sphi 0, %s48
      %s65 = sphi 0, %s49
      %s75 = sphi 0, %s77
      %s78 = sphi 0, %s75
      %s79 = sphi 0, %s78
      %s95 = sphi 0, %s79
      %s101 = sphi 0, %s103
      %s104 = sphi 0, %s101
      %s105 = sphi 0, %s104
      %s121 = sphi 0, %s105
    $region4: #{tpu_custom_call.1} parent=1 // loop_header_branch
      %17 = sbr.rel (%p15) target = $region8
    $region5: #{tpu_custom_call.1} parent=1 // loop_body
      %s19 = ssub.s32 %s14, 1
      %s20 = ssub.s32 %s14, 2
      %s30 = sadd.s32 1, %s23
      %p31 = scmp.ge.s32.totalorder %s30, 1
      %s32 = scalar_select %p31, 0, %s30
      %s33 = sadd.s32 1, %s22
      %s34 = scalar_select %p31, %s33, %s22
      %p35 = scmp.ge.s32.totalorder %s34, 1
      %s36 = scalar_select %p35, 0, %s34
      %s37 = sadd.s32 1, %s21
      %s38 = scalar_select %p35, %s37, %s21
      %p39 = scmp.ge.s32.totalorder %s38, 2
      %s40 = scalar_select %p39, 0, %s38
      %s41 = ssub.s32 %s21, %s40
      %s42 = ssub.s32 %s22, %s36
      %s43 = sor.u32 %s41, %s42
      %p44 = scmp.eq.s32.totalorder %s43, 0
      %s46 = sadd.s32 %s45, 1
      %s47 = scalar_select %p44, %s45, %s46
      %p50 = pneg %p44
      %p51 = scmp.eq.s32.totalorder %s14, 1
      %p52 = por %p50, %p51
      %p53 = scmp.ne.s32.totalorder %s45, %s48
      %p54 = scmp.eq.s32.totalorder %s14, 0
      %p55 = por %p53, %p54
      %p56 = scmp.ne.s32.totalorder %s45, %s48
      %p57 = scmp.eq.s32.totalorder %s19, 1
      %p58 = por %p56, %p57
      %p59 = scmp.ne.s32.totalorder %s48, %s49
      %p60 = scmp.eq.s32.totalorder %s19, 0
      %p61 = por %p59, %p60
      %p62 = scmp.ne.s32.totalorder %s48, %s49
      %p63 = scmp.eq.s32.totalorder %s20, 1
      %p64 = por %p62, %p63
      %p66 = scmp.ne.s32.totalorder %s49, %s65
      %p67 = scmp.eq.s32.totalorder %s20, 0
      %p68 = por %p66, %p67
      %s69 = ssub.s32 %s21, %s40
      %s70 = ssub.s32 %s23, %s32
      %s71 = sor.u32 %s69, %s70
      %s72 = ssub.s32 %s22, %s36
      %s73 = sor.u32 %s71, %s72
      %p74 = scmp.eq.s32.totalorder %s73, 0
      %s76 = sadd.s32 %s75, 1
      %s77 = scalar_select %p74, %s75, %s76
      %p80 = pneg %p74
      %p81 = scmp.eq.s32.totalorder %s14, 1
      %p82 = por %p80, %p81
      %p83 = scmp.ne.s32.totalorder %s75, %s78
      %p84 = scmp.eq.s32.totalorder %s14, 0
      %p85 = por %p83, %p84
      %p86 = scmp.ne.s32.totalorder %s75, %s78
      %p87 = scmp.eq.s32.totalorder %s19, 1
      %p88 = por %p86, %p87
      %p89 = scmp.ne.s32.totalorder %s78, %s79
      %p90 = scmp.eq.s32.totalorder %s19, 0
      %p91 = por %p89, %p90
      %p92 = scmp.ne.s32.totalorder %s78, %s79
      %p93 = scmp.eq.s32.totalorder %s20, 1
      %p94 = por %p92, %p93
      %p96 = scmp.ne.s32.totalorder %s79, %s95
      %p97 = scmp.eq.s32.totalorder %s20, 0
      %p98 = por %p96, %p97
      %s99 = ssub.s32 %s21, %s40
      %p100 = scmp.eq.s32.totalorder %s99, 0
      %s102 = sadd.s32 %s101, 1
      %s103 = scalar_select %p100, %s101, %s102
      %p106 = pneg %p100
      %p107 = scmp.eq.s32.totalorder %s14, 1
      %p108 = por %p106, %p107
      %p109 = scmp.ne.s32.totalorder %s101, %s104
      %p110 = scmp.eq.s32.totalorder %s14, 0
      %p111 = por %p109, %p110
      %p112 = scmp.ne.s32.totalorder %s101, %s104
      %p113 = scmp.eq.s32.totalorder %s19, 1
      %p114 = por %p112, %p113
      %p115 = scmp.ne.s32.totalorder %s104, %s105
      %p116 = scmp.eq.s32.totalorder %s19, 0
      %p117 = por %p115, %p116
      %p118 = scmp.ne.s32.totalorder %s104, %s105
      %p119 = scmp.eq.s32.totalorder %s20, 1
      %p120 = por %p118, %p119
      %p122 = scmp.ne.s32.totalorder %s105, %s121
      %p123 = scmp.eq.s32.totalorder %s20, 0
      %p124 = por %p122, %p123
      %p125 = scmp.le.s32.totalorder 1, %s14
      %p126 = scmp.lt.s32.totalorder %s14, 3
      %p127 = pnand %p125, %p126
      %p128 = pneg %p127
      // Predicated region
      $region9: #{tpu_custom_call.1} parent=5 // pred_check
        _
      $region10: #{tpu_custom_call.1} parent=5 // pred_check_branch
        %130 = sbr.rel (%p127) target = $region12
      $region11: #{tpu_custom_call.1} parent=5 // pred_region
        %s131 = ssub.s32 %s14, 1
      $region12: #{tpu_custom_call.1} parent=5 // pred_fallthru
        _
      %p132 = scmp.lt.s32.totalorder %s14, 2
      // Predicated region
      $region13: #{tpu_custom_call.1} parent=5 // pred_check
        %p133 = pneg %p132
      $region14: #{tpu_custom_call.1} parent=5 // pred_check_branch
        %135 = sbr.rel (%p133) target = $region16
      $region15: #{tpu_custom_call.1} parent=5 // pred_region
        // Predicated region
        $region17: #{tpu_custom_call.1} parent=15 // pred_check
          %p136 = pneg %p55
        $region18: #{tpu_custom_call.1} parent=15 // pred_check_branch
          %138 = sbr.rel (%p136) target = $region20
        $region19: #{tpu_custom_call.1} parent=15 // pred_region
          %s139 = sand.u32 %s45, 1
          %s140 = scalar_lea.sflag [#allocation6], %s139
          %s141 = sand.u32 %s45, 1
          %s142 = smul.addr %s141, 2
          %s143 = scalar_lea.vmem [#allocation5], %s142
          %s145 = ssub.s32 32, 32
          %146 = vsyncadd %s140, %s145
          %s147 = sadd.s32 %s22, %s21
          %s148 = smul.addr %s147, 32
          %s149 = scalar_lea.hbm %s0, %s148
          %s151 = sshll.u32 %s143, 4
          %s152 = int_to_ptr.vmem [resolvable:$true] %s151
          %154 = dma.hbm_to_vmem [thread:$0]  %s149, 32, %s152, %s140
        $region20: #{tpu_custom_call.1} parent=15 // pred_fallthru
          _
        // Predicated region
        $region21: #{tpu_custom_call.1} parent=15 // pred_check
          %p155 = pneg %p85
        $region22: #{tpu_custom_call.1} parent=15 // pred_check_branch
          %157 = sbr.rel (%p155) target = $region24
        $region23: #{tpu_custom_call.1} parent=15 // pred_region
          %s158 = sand.u32 %s75, 1
          %s159 = scalar_lea.sflag [#allocation8], %s158
          %s160 = sand.u32 %s75, 1
          %s161 = smul.addr %s160, 2
          %s162 = scalar_lea.vmem [#allocation7], %s161
          %s164 = ssub.s32 32, 32
          %165 = vsyncadd %s159, %s164
          %s166 = sadd.s32 %s22, %s23
          %s167 = sadd.s32 %s166, %s21
          %s168 = smul.addr %s167, 32
          %s169 = scalar_lea.hbm %s1, %s168
          %s171 = sshll.u32 %s162, 4
          %s172 = int_to_ptr.vmem [resolvable:$true] %s171
          %174 = dma.hbm_to_vmem [thread:$0]  %s169, 32, %s172, %s159
        $region24: #{tpu_custom_call.1} parent=15 // pred_fallthru
          _
      $region16: #{tpu_custom_call.1} parent=5 // pred_fallthru
        _
      %p175 = scmp.le.s32.totalorder 1, %s14
      %p176 = scmp.lt.s32.totalorder %s14, 3
      %p177 = pnand %p175, %p176
      %p178 = pneg %p177
      // Predicated region
      $region25: #{tpu_custom_call.1} parent=5 // pred_check
        _
      $region26: #{tpu_custom_call.1} parent=5 // pred_check_branch
        %180 = sbr.rel (%p177) target = $region28
      $region27: #{tpu_custom_call.1} parent=5 // pred_region
        %s181 = ssub.s32 %s14, 1
        %s182 = sand.u32 %s48, 1
        %s183 = scalar_lea.sflag [#allocation6], %s182
        %s184 = sand.u32 %s48, 1
        %s185 = smul.addr %s184, 2
        %s186 = scalar_lea.vmem [#allocation5], %s185
        // Predicated region
        $region29: #{tpu_custom_call.1} parent=27 // pred_check
          %p187 = pneg %p61
        $region30: #{tpu_custom_call.1} parent=27 // pred_check_branch
          %189 = sbr.rel (%p187) target = $region32
        $region31: #{tpu_custom_call.1} parent=27 // pred_region
          %190 = dma.done %s183, 32
        $region32: #{tpu_custom_call.1} parent=27 // pred_fallthru
          _
        %s191 = sand.u32 %s78, 1
        %s192 = scalar_lea.sflag [#allocation8], %s191
        %s193 = sand.u32 %s78, 1
        %s194 = smul.addr %s193, 2
        %s195 = scalar_lea.vmem [#allocation7], %s194
        // Predicated region
        $region33: #{tpu_custom_call.1} parent=27 // pred_check
          %p196 = pneg %p91
        $region34: #{tpu_custom_call.1} parent=27 // pred_check_branch
          %198 = sbr.rel (%p196) target = $region36
        $region35: #{tpu_custom_call.1} parent=27 // pred_region
          %199 = dma.done %s192, 32
        $region36: #{tpu_custom_call.1} parent=27 // pred_fallthru
          _
        %s200 = sand.u32 %s48, 1
        %s201 = scalar_lea.sflag [#allocation6], %s200
        %s202 = sand.u32 %s48, 1
        %s203 = smul.addr %s202, 2
        %s204 = scalar_lea.vmem [#allocation5], %s203
        %p205 = pneg %p61
        %p206 = pneg %p58
        %s207 = sand.u32 %s78, 1
        %s208 = scalar_lea.sflag [#allocation8], %s207
        %s209 = sand.u32 %s78, 1
        %s210 = smul.addr %s209, 2
        %s211 = scalar_lea.vmem [#allocation7], %s210
        %p212 = pneg %p91
        %p213 = pneg %p88
        %p214 = pneg %p117
        %p215 = pneg %p114
        %p216 = scmp.lt.s32.totalorder %s24, 1
        %s217 = scalar_select %p216, %s24, 1
        %s218 = scalar_lea.vmem %s2, %s217
        %p219 = scmp.lt.s32.totalorder %s24, 1
        %s220 = scalar_select %p219, %s24, 1
        %s221 = scalar_lea.vmem %s2, %s220
        %p222 = scmp.eq.s32.totalorder %s25, 0
        %p223 = scmp.eq.s32.totalorder %s26, 0
        %p224 = pnand %p222, %p223
        %p225 = pneg %p224
        // Predicated region
        $region37: #{tpu_custom_call.1} parent=27 // pred_check
          _
        $region38: #{tpu_custom_call.1} parent=27 // pred_check_branch
          %227 = sbr.rel (%p224) target = $region40
        $region39: #{tpu_custom_call.1} parent=27 // pred_region
          %228 = vst [vmem:[#allocation2] sm:$0x3] 0.0
          %229 = vst [vmem:[#allocation3] sm:$0x3] 0.0
          %230 = vst [vmem:[#allocation4] sm:$0x3] 0.0
        $region40: #{tpu_custom_call.1} parent=27 // pred_fallthru
          _
        %v231 = vld [vmem:[%s186] sm:$0x3]
        %v232 = vld [vmem:[%s195] sm:$0x3]
        %vm233 = vcmp.gt.f32.partialorder %v232, 0.001
        %vm234 = vcmp.lt.f32.partialorder %v232, 10.0
        %vm235 = vmand %vm233, %vm234
        %v236 = vrcp.pop %v232
        %v237 = vmul.f32 %v231, %v236
        %v238 = vlog2.pop %v237
        %v239 = vmul.f32 %v238, 0.6931472
        %v240 = vsel %vm235, %v239, 0.0
        %v241 = vld [vmem:[#allocation2] sm:$0x3]
        %v242 = vmul.f32 %v240, %v240
        %v243 = vadd.f32 %v241, %v242
        %244 = vst [vmem:[#allocation2] sm:$0x3] %v243
        %v245 = vld [vmem:[#allocation3] sm:$0x3]
        %v246 = vadd.f32 %v245, %v240
        %247 = vst [vmem:[#allocation3] sm:$0x3] %v246
        %v248 = vld [vmem:[#allocation4] sm:$0x3]
        %v249 = vsel %vm235, 1, 0
        %v250 = vcvt.s32.f32 %v249
        %v251 = vadd.f32 %v248, %v250
        %252 = vst [vmem:[#allocation4] sm:$0x3] %v251
        // Predicated region
        $region41: #{tpu_custom_call.1} parent=27 // pred_check
          _
        $region42: #{tpu_custom_call.1} parent=27 // pred_check_branch
          %254 = sbr.rel (%p224) target = $region44
        $region43: #{tpu_custom_call.1} parent=27 // pred_region
          %v255 = vld [vmem:[#allocation4] sm:$0x3]
          %vm256 = vcmask 1041408
          %v257 = vsel %vm256, %v255, 0.0
          %258 = vadd.xlane.f32.xlu0 %v257
          %v259 = vpop.xlane.xlu0 %258
          %v260 = vrot.slane %v259, 4
          %v261 = vadd.f32 %v259, %v260
          %v262 = vrot.slane %v261, 2
          %v263 = vadd.f32 %v261, %v262
          %v264 = vrot.slane %v263, 1
          %v265 = vadd.f32 %v263, %v264
          %s266 = vtos %v265
          %v267 = vstv %s266
          %v268 = vadd.f32 %v267, 1e-06
          %v269 = vld [vmem:[#allocation2] sm:$0x3]
          %v270 = vsel %vm256, %v269, 0.0
          %271 = vadd.xlane.f32.xlu0 %v270
          %v272 = vpop.xlane.xlu0 %271
          %v273 = vrot.slane %v272, 4
          %v274 = vadd.f32 %v272, %v273
          %v275 = vrot.slane %v274, 2
          %v276 = vadd.f32 %v274, %v275
          %v277 = vrot.slane %v276, 1
          %v278 = vadd.f32 %v276, %v277
          %s279 = vtos %v278
          %v280 = vstv %s279
          %v281 = vld [vmem:[#allocation3] sm:$0x3]
          %v282 = vsel %vm256, %v281, 0.0
          %283 = vadd.xlane.f32.xlu0 %v282
          %v284 = vpop.xlane.xlu0 %283
          %v285 = vrot.slane %v284, 4
          %v286 = vadd.f32 %v284, %v285
          %v287 = vrot.slane %v286, 2
          %v288 = vadd.f32 %v286, %v287
          %v289 = vrot.slane %v288, 1
          %v290 = vadd.f32 %v288, %v289
          %s291 = vtos %v290
          %v292 = vstv %s291
          %v293 = vrcp.pop %v268
          %v294 = vmul.f32 %v280, %v293
          %v295 = vmul.f32 %v292, %v293
          %v296 = vmul.f32 %v295, %v295
          %v297 = vmul.f32 %v296, 0.85
          %v298 = vsub.f32 %v294, %v297
          %v299 = vrcp.pop 256.0
          %v300 = vmul.f32 %v268, %v299
          %v301 = vmul.f32 %v298, %v300
          %vm302 = vcmask 0
          %303 = vst.msk [vmem:[%s221] sm:$0x1] %vm302, %v301
        $region44: #{tpu_custom_call.1} parent=27 // pred_fallthru
          _
        %p304 = scmp.lt.s32.totalorder %s24, 1
        %s305 = scalar_select %p304, %s24, 1
        %s306 = scalar_lea.vmem %s2, %s305
        // Predicated region
        $region45: #{tpu_custom_call.1} parent=27 // pred_check
          %p307 = pneg %p114
        $region46: #{tpu_custom_call.1} parent=27 // pred_check_branch
          %309 = sbr.rel (%p307) target = $region48
        $region47: #{tpu_custom_call.1} parent=27 // pred_region
          _
        $region48: #{tpu_custom_call.1} parent=27 // pred_fallthru
          _
      $region28: #{tpu_custom_call.1} parent=5 // pred_fallthru
        _
      %p310 = scmp.le.s32.totalorder 2, %s14
      // Predicated region
      $region49: #{tpu_custom_call.1} parent=5 // pred_check
        %p311 = pneg %p310
      $region50: #{tpu_custom_call.1} parent=5 // pred_check_branch
        %313 = sbr.rel (%p311) target = $region52
      $region51: #{tpu_custom_call.1} parent=5 // pred_region
        %s314 = ssub.s32 %s14, 2
        // Predicated region
        $region53: #{tpu_custom_call.1} parent=51 // pred_check
          %p315 = pneg %p120
        $region54: #{tpu_custom_call.1} parent=51 // pred_check_branch
          %317 = sbr.rel (%p315) target = $region56
        $region55: #{tpu_custom_call.1} parent=51 // pred_region
          %p318 = scmp.lt.s32.totalorder %s27, 1
          %s319 = scalar_select %p318, %s27, 1
          %s320 = scalar_lea.vmem %s2, %s319
        $region56: #{tpu_custom_call.1} parent=51 // pred_fallthru
          _
      $region52: #{tpu_custom_call.1} parent=5 // pred_fallthru
        _
    $region6: #{tpu_custom_call.1} parent=1 // loop_footer
      %s18 = sadd.s32 1, %s14
    $region7: #{tpu_custom_call.1} parent=1 // loop_footer_branch
      %13 = sbr.rel target = $region3
    $region8: #{tpu_custom_call.1} parent=1 // loop_exit
      _
    %321 = vsyncpa [#allocation6], 1
    %s322 = scalar_lea.sflag [#allocation6], 1
    %323 = vsyncpa %s322, 1
    %324 = vsyncpa [#allocation8], 1
    %s325 = scalar_lea.sflag [#allocation8], 1
    %326 = vsyncpa %s325, 1

</llo_original>
